<compile_context>
chip_gen: v5e
topology: v5e:2x2
jax: 0.10.0
libtpu: 0.0.40
codegen_flags: <defaults>
</compile_context>

<pallas_src>
import jax
import jax.numpy as jnp
from jax.experimental import pallas as pl
from jax.experimental.pallas import tpu as pltpu

IN_FEATURES = 10
OUT_FEATURES = 3
FOLD = 8  # batch rows packed per VMEM lane-row (free row-major reshape)


def _round_up(n, m):
    return ((n + m - 1) // m) * m


def _linear_kernel(x_ref, w_ref, b_ref, o_ref):
    # x_ref: (tbf, FOLD*IN)        streamed folded-batch tile
    # w_ref: (FOLD*IN, FOLD*OUT)   block-diagonal kron(I_FOLD, W^T), VMEM-resident
    # b_ref: (1, FOLD*OUT)         tiled bias, VMEM-resident
    # o_ref: (tbf, FOLD*OUT)
    acc = jnp.dot(x_ref[...], w_ref[...], preferred_element_type=jnp.float32)
    o_ref[...] = (acc + b_ref[...]).astype(o_ref.dtype)


def mock_model_forward(x, weight, bias, *, block_b=32768, min_pallas_batch=4096):
    """x: (B, 10) f32; weight: (3, 10) f32 (PyTorch layout); bias: (3,) f32."""
    B = x.shape[0]

    # Small or FOLD-ragged batches: fused XLA op (launch/DMA setup would dominate).
    if B < max(min_pallas_batch, 1) or B % FOLD != 0:
        return x @ weight.T + bias

    bf = B // FOLD
    kin = FOLD * IN_FEATURES     # 80
    kout = FOLD * OUT_FEATURES   # 24

    # Free row-major reshape (no data movement): 8 batch rows per lane-row.
    xf = x.reshape(bf, kin)
    # Block-diagonal weight so one MXU dot handles all 8 packed rows; tiny (80x24).
    w_big = jnp.kron(jnp.eye(FOLD, dtype=weight.dtype), weight.T)
    b_big = jnp.tile(bias, FOLD).reshape(1, kout)

    # Folded-row tile: multiple of 8 sublanes, or the full (possibly tiny) array.
    tbf = min(block_b // FOLD, bf)
    tbf = max(8, (tbf // 8) * 8)
    if tbf > bf:
        tbf = bf                                   # tiny batch: single full block
    elif tbf == bf and bf >= 16:
        tbf = _round_up(pl.cdiv(bf, 2), 8)         # keep >=2 steps for v7x megacore
    grid = (pl.cdiv(bf, tbf),)                     # no full-tile batch padding

    out_f = pl.pallas_call(
        _linear_kernel,
        out_shape=jax.ShapeDtypeStruct((bf, kout), x.dtype),
        grid_spec=pl.GridSpec(
            grid=grid,
            in_specs=[
                # x: streamed batch tiles (auto double-buffered).
                pl.BlockSpec((tbf, kin), lambda i: (i, 0)),
                # weight/bias: constant index maps -> loaded once, stay resident.
                pl.BlockSpec((kin, kout), lambda i: (0, 0)),
                pl.BlockSpec((1, kout), lambda i: (0, 0)),
            ],
            out_specs=pl.BlockSpec((tbf, kout), lambda i: (i, 0)),
        ),
        compiler_params=pltpu.CompilerParams(
            dimension_semantics=("parallel",),      # shard batch tiles across TCs
        ),
        cost_estimate=pl.CostEstimate(
            flops=2 * bf * kin * kout,
            transcendentals=0,
            bytes_accessed=4 * B * (IN_FEATURES + OUT_FEATURES),
        ),
    )(xf, w_big, b_big)

    return out_f.reshape(B, OUT_FEATURES)           # free reshape back to (B, 3)


def init_params(key):
    # Deterministic init mimicking PyTorch nn.Linear default:
    # U(-1/sqrt(in_features), 1/sqrt(in_features)) for both weight and bias.
    kw, kb = jax.random.split(key)
    bound = 1.0 / jnp.sqrt(jnp.float32(IN_FEATURES))
    weight = jax.random.uniform(
        kw, (OUT_FEATURES, IN_FEATURES), jnp.float32, -bound, bound)
    bias = jax.random.uniform(
        kb, (OUT_FEATURES,), jnp.float32, -bound, bound)
    return weight, bias


if __name__ == "__main__":
    key = jax.random.PRNGKey(0)
    k_x, k_p = jax.random.split(key)

    # Small demo batch; block_b=256 -> 4-step "parallel" grid exercising the
    # pipeline (production defaults use block_b=32768, min_pallas_batch=4096).
    B = 1024
    x = jax.random.normal(k_x, (B, IN_FEATURES), jnp.float32)
    weight, bias = init_params(k_p)

    out = mock_model_forward(x, weight, bias, block_b=256, min_pallas_batch=0)
    out = jax.block_until_ready(out)

    # Sanity check against plain-JAX reference of the same forward pass.
    ref = x @ weight.T + bias
    assert out.shape == (B, OUT_FEATURES)
    assert jnp.allclose(out, ref, atol=1e-5, rtol=1e-5)

    print("KERNEL_OK")
</pallas_src>

<mosaic_0001>
module attributes {stable_mosaic.version = 11 : i64} {
  func.func @_linear_kernel(%arg0: i32, %arg1: memref<32x80xf32, #tpu.memory_space<vmem>>, %arg2: memref<80x24xf32, #tpu.memory_space<vmem>>, %arg3: memref<1x24xf32, #tpu.memory_space<vmem>>, %arg4: memref<32x24xf32, #tpu.memory_space<vmem>>) attributes {dimension_semantics = [#tpu.dimension_semantics<parallel>], iteration_bounds = array<i64: 4>, scalar_prefetch = 0 : i64, scratch_operands = 0 : i64, tpu.core_type = #tpu.core_type<tc>, window_params = [{transform_indices = @transform_0, window_bounds = array<i64: 32, 80>}, {pipeline_mode = #tpu.pipeline_mode<synchronous>, transform_indices = @transform_1, window_bounds = array<i64: 80, 24>}, {pipeline_mode = #tpu.pipeline_mode<synchronous>, transform_indices = @transform_2, window_bounds = array<i64: 1, 24>}, {transform_indices = @transform_3, window_bounds = array<i64: 32, 24>}]} {
    %c0 = arith.constant 0 : index
    %c0_0 = arith.constant 0 : index
    %0 = vector.load %arg1[%c0, %c0_0] : memref<32x80xf32, #tpu.memory_space<vmem>>, vector<32x80xf32>
    %c0_1 = arith.constant 0 : index
    %c0_2 = arith.constant 0 : index
    %1 = vector.load %arg2[%c0_1, %c0_2] : memref<80x24xf32, #tpu.memory_space<vmem>>, vector<80x24xf32>
    %cst = arith.constant dense<0.000000e+00> : vector<32x24xf32>
    %2 = tpu.matmul %0, %1, %cst {dimension_numbers = #tpu.dot_dimension_numbers<[1], [0], [0], [1], [0, 0, 1, 1], [], []>} : vector<32x80xf32>, vector<80x24xf32>, vector<32x24xf32> -> vector<32x24xf32>
    %c0_3 = arith.constant 0 : index
    %c0_4 = arith.constant 0 : index
    %3 = vector.load %arg3[%c0_3, %c0_4] : memref<1x24xf32, #tpu.memory_space<vmem>>, vector<1x24xf32>
    %4 = vector.broadcast %3 : vector<1x24xf32> to vector<32x24xf32>
    %5 = arith.addf %2, %4 : vector<32x24xf32>
    %c0_5 = arith.constant 0 : index
    %c0_6 = arith.constant 0 : index
    %6 = vector.load %arg4[%c0_5, %c0_6] : memref<32x24xf32, #tpu.memory_space<vmem>>, vector<32x24xf32>
    tpu.vector_store %arg4[%c0_5, %c0_6], %5 {strides = array<i32>} : memref<32x24xf32, #tpu.memory_space<vmem>>, vector<32x24xf32>,
    return
  }
  func.func @transform_0(%arg0: i32) -> (i32, i32) {
    %c0_i32 = arith.constant 0 : i32
    %c0_i32_0 = arith.constant 0 : i32
    return %arg0, %c0_i32 : i32, i32
  }
  func.func @transform_1(%arg0: i32) -> (i32, i32) {
    %c0_i32 = arith.constant 0 : i32
    %c0_i32_0 = arith.constant 0 : i32
    %c0_i32_1 = arith.constant 0 : i32
    return %c0_i32, %c0_i32_0 : i32, i32
  }
  func.func @transform_2(%arg0: i32) -> (i32, i32) {
    %c0_i32 = arith.constant 0 : i32
    %c0_i32_0 = arith.constant 0 : i32
    %c0_i32_1 = arith.constant 0 : i32
    return %c0_i32, %c0_i32_0 : i32, i32
  }
  func.func @transform_3(%arg0: i32) -> (i32, i32) {
    %c0_i32 = arith.constant 0 : i32
    %c0_i32_0 = arith.constant 0 : i32
    return %arg0, %c0_i32 : i32, i32
  }
}

</mosaic_0001>

<llo_original>
// kernel: tpu_custom_call.1
$region0: #{tpu_custom_call.1}
  #allocation0 [shape = 'u32[]', space=smem, size = 0x4, offset = 0x4, fixed_abs, tag = 'smem constant byte address 0x4 - core index']
  #allocation1 [shape = 'u32[72,128]{1,0:T(1,128)}', space=vmem, size = 0x9000, scoped, tag = 'internal scratch']
  %s0 = inlined_call_operand.vmem [shape: f32[128,80], index: 0, kind: input, shape index: {}]
  %s1 = inlined_call_operand.vmem [shape: f32[80,24], index: 1, kind: input, shape index: {}]
  %s2 = inlined_call_operand.vmem [shape: f32[1,24], index: 2, kind: input, shape index: {}]
  %s3 = inlined_call_operand.vmem [shape: f32[128,24], index: 3, kind: output, shape index: {}]
  %s4 = sld [smem:[#allocation0]]
  $region45: #{tpu_custom_call.1} parent=0
    _
  %s6 = ssub.s32 1, %s4
  %s7 = scalar_select 0, %s6, %s4
  loop: start=0, step=1, limit=6
  $region2: #{tpu_custom_call.1} parent=0 // loop_pre_header
    _
  $region3: #{tpu_custom_call.1} parent=0 // loop_header
    %s9 = sphi 0, %s13
    %p10 = scmp.ge.s32.totalorder %s9, 6
    %s19 = sphi 0, %s21
    %s22 = sphi 0, %s19
    %s23 = sphi 0, %s22
    %s39 = sphi 0, %s23
    %s43 = sphi 0, %s43
    %s45 = sphi 0, %s43
    %s46 = sphi 0, %s45
    %s60 = sphi 0, %s46
    %s64 = sphi 0, %s64
    %s66 = sphi 0, %s64
    %s67 = sphi 0, %s66
    %s81 = sphi 0, %s67
    %s87 = sphi 0, %s89
    %s90 = sphi 0, %s87
    %s91 = sphi 0, %s90
    %s107 = sphi 0, %s91
  $region4: #{tpu_custom_call.1} parent=0 // loop_header_branch
    %12 = sbr.rel (%p10) target = $region8
  $region5: #{tpu_custom_call.1} parent=0 // loop_body
    %s14 = ssub.s32 %s9, 1
    %s15 = ssub.s32 %s9, 2
    %s16 = sadd.s32 %s9, 1
    %s17 = ssub.s32 %s9, %s16
    %p18 = scmp.eq.s32.totalorder %s17, 0
    %s20 = sadd.s32 %s19, 1
    %s21 = scalar_select %p18, %s19, %s20
    %p24 = pneg %p18
    %p25 = scmp.eq.s32.totalorder %s9, 3
    %p26 = por %p24, %p25
    %p27 = scmp.ne.s32.totalorder %s19, %s22
    %p28 = scmp.eq.s32.totalorder %s9, 0
    %p29 = por %p27, %p28
    %p30 = scmp.ne.s32.totalorder %s19, %s22
    %p31 = scmp.eq.s32.totalorder %s14, 3
    %p32 = por %p30, %p31
    %p33 = scmp.ne.s32.totalorder %s22, %s23
    %p34 = scmp.eq.s32.totalorder %s14, 0
    %p35 = por %p33, %p34
    %p36 = scmp.ne.s32.totalorder %s22, %s23
    %p37 = scmp.eq.s32.totalorder %s15, 3
    %p38 = por %p36, %p37
    %p40 = scmp.ne.s32.totalorder %s23, %s39
    %p41 = scmp.eq.s32.totalorder %s15, 0
    %p42 = por %p40, %p41
    %s44 = sadd.s32 %s43, 1
    %p47 = scmp.eq.s32.totalorder %s9, 3
    %p48 = scmp.ne.s32.totalorder %s43, %s45
    %p49 = scmp.eq.s32.totalorder %s9, 0
    %p50 = por %p48, %p49
    %p51 = scmp.ne.s32.totalorder %s43, %s45
    %p52 = scmp.eq.s32.totalorder %s14, 3
    %p53 = por %p51, %p52
    %p54 = scmp.ne.s32.totalorder %s45, %s46
    %p55 = scmp.eq.s32.totalorder %s14, 0
    %p56 = por %p54, %p55
    %p57 = scmp.ne.s32.totalorder %s45, %s46
    %p58 = scmp.eq.s32.totalorder %s15, 3
    %p59 = por %p57, %p58
    %p61 = scmp.ne.s32.totalorder %s46, %s60
    %p62 = scmp.eq.s32.totalorder %s15, 0
    %p63 = por %p61, %p62
    %s65 = sadd.s32 %s64, 1
    %p68 = scmp.eq.s32.totalorder %s9, 3
    %p69 = scmp.ne.s32.totalorder %s64, %s66
    %p70 = scmp.eq.s32.totalorder %s9, 0
    %p71 = por %p69, %p70
    %p72 = scmp.ne.s32.totalorder %s64, %s66
    %p73 = scmp.eq.s32.totalorder %s14, 3
    %p74 = por %p72, %p73
    %p75 = scmp.ne.s32.totalorder %s66, %s67
    %p76 = scmp.eq.s32.totalorder %s14, 0
    %p77 = por %p75, %p76
    %p78 = scmp.ne.s32.totalorder %s66, %s67
    %p79 = scmp.eq.s32.totalorder %s15, 3
    %p80 = por %p78, %p79
    %p82 = scmp.ne.s32.totalorder %s67, %s81
    %p83 = scmp.eq.s32.totalorder %s15, 0
    %p84 = por %p82, %p83
    %s85 = ssub.s32 %s9, %s16
    %p86 = scmp.eq.s32.totalorder %s85, 0
    %s88 = sadd.s32 %s87, 1
    %s89 = scalar_select %p86, %s87, %s88
    %p92 = pneg %p86
    %p93 = scmp.eq.s32.totalorder %s9, 3
    %p94 = por %p92, %p93
    %p95 = scmp.ne.s32.totalorder %s87, %s90
    %p96 = scmp.eq.s32.totalorder %s9, 0
    %p97 = por %p95, %p96
    %p98 = scmp.ne.s32.totalorder %s87, %s90
    %p99 = scmp.eq.s32.totalorder %s14, 3
    %p100 = por %p98, %p99
    %p101 = scmp.ne.s32.totalorder %s90, %s91
    %p102 = scmp.eq.s32.totalorder %s14, 0
    %p103 = por %p101, %p102
    %p104 = scmp.ne.s32.totalorder %s90, %s91
    %p105 = scmp.eq.s32.totalorder %s15, 3
    %p106 = por %p104, %p105
    %p108 = scmp.ne.s32.totalorder %s91, %s107
    %p109 = scmp.eq.s32.totalorder %s15, 0
    %p110 = por %p108, %p109
    %p111 = scmp.le.s32.totalorder 1, %s9
    %p112 = scmp.lt.s32.totalorder %s9, 5
    %p113 = pnand %p111, %p112
    %p114 = pneg %p113
    // Predicated region
    $region9: #{tpu_custom_call.1} parent=5 // pred_check
      _
    $region10: #{tpu_custom_call.1} parent=5 // pred_check_branch
      %116 = sbr.rel (%p113) target = $region12
    $region11: #{tpu_custom_call.1} parent=5 // pred_region
      %s117 = ssub.s32 %s9, 1
      // Predicated region
      $region13: #{tpu_custom_call.1} parent=11 // pred_check
        %p118 = pneg %p56
      $region14: #{tpu_custom_call.1} parent=11 // pred_check_branch
        %120 = sbr.rel (%p118) target = $region16
      $region15: #{tpu_custom_call.1} parent=11 // pred_region
        _
      $region16: #{tpu_custom_call.1} parent=11 // pred_fallthru
        _
      // Predicated region
      $region17: #{tpu_custom_call.1} parent=11 // pred_check
        %p121 = pneg %p77
      $region18: #{tpu_custom_call.1} parent=11 // pred_check_branch
        %123 = sbr.rel (%p121) target = $region20
      $region19: #{tpu_custom_call.1} parent=11 // pred_region
        _
      $region20: #{tpu_custom_call.1} parent=11 // pred_fallthru
        _
    $region12: #{tpu_custom_call.1} parent=5 // pred_fallthru
      _
    %p124 = scmp.lt.s32.totalorder %s9, 4
    // Predicated region
    $region21: #{tpu_custom_call.1} parent=5 // pred_check
      %p125 = pneg %p124
    $region22: #{tpu_custom_call.1} parent=5 // pred_check_branch
      %127 = sbr.rel (%p125) target = $region24
    $region23: #{tpu_custom_call.1} parent=5 // pred_region
      // Predicated region
      $region25: #{tpu_custom_call.1} parent=23 // pred_check
        %p128 = pneg %p29
      $region26: #{tpu_custom_call.1} parent=23 // pred_check_branch
        %130 = sbr.rel (%p128) target = $region28
      $region27: #{tpu_custom_call.1} parent=23 // pred_region
        %s131 = smul.u32 4, %s9
        %p132 = scmp.lt.s32.totalorder %s131, 15
        %s133 = scalar_select %p132, %s131, 15
        %s134 = smul.addr %s133, 8
        %s135 = scalar_lea.vmem %s0, %s134
        %s136 = smul.u32 4, %s9
      $region28: #{tpu_custom_call.1} parent=23 // pred_fallthru
        _
    $region24: #{tpu_custom_call.1} parent=5 // pred_fallthru
      _
    %p137 = scmp.le.s32.totalorder 1, %s9
    %p138 = scmp.lt.s32.totalorder %s9, 5
    %p139 = pnand %p137, %p138
    %p140 = pneg %p139
    // Predicated region
    $region29: #{tpu_custom_call.1} parent=5 // pred_check
      _
    $region30: #{tpu_custom_call.1} parent=5 // pred_check_branch
      %142 = sbr.rel (%p139) target = $region32
    $region31: #{tpu_custom_call.1} parent=5 // pred_region
      %s143 = ssub.s32 %s9, 1
      %s144 = smul.u32 4, %s14
      %p145 = scmp.lt.s32.totalorder %s144, 15
      %s146 = scalar_select %p145, %s144, 15
      %s147 = smul.addr %s146, 8
      %s148 = scalar_lea.vmem %s0, %s147
      %p149 = pneg %p35
      %p150 = pneg %p32
      %p151 = pneg %p56
      %p152 = pneg %p53
      %p153 = pneg %p77
      %p154 = pneg %p74
      %p155 = pneg %p103
      %p156 = pneg %p100
      %s157 = smul.u32 4, %s14
      %p158 = scmp.lt.s32.totalorder %s157, 15
      %s159 = scalar_select %p158, %s157, 15
      %s160 = smul.addr %s159, 8
      %s161 = scalar_lea.vmem %s3, %s160
      %s162 = smul.u32 4, %s14
      %p163 = scmp.lt.s32.totalorder %s162, 15
      %s164 = scalar_select %p163, %s162, 15
      %s165 = smul.addr %s164, 8
      %s166 = scalar_lea.vmem %s0, %s165
      %s167 = smul.u32 4, %s14
      %s168 = smul.u32 4, %s14
      %p169 = scmp.lt.s32.totalorder %s168, 15
      %s170 = scalar_select %p169, %s168, 15
      %s171 = smul.addr %s170, 8
      %s172 = scalar_lea.vmem %s3, %s171
      %s173 = smul.u32 4, %s14
      %v174 = vld [vmem:[%s166] sm:$0xff]
      %v175 = vld [vmem:[%s166 + $0x8] sm:$0xff]
      %v176 = vld [vmem:[%s166 + $0x10] sm:$0xff]
      %v177 = vld [vmem:[%s166 + $0x18] sm:$0xff]
      %v178 = vld [vmem:[%s1] sm:$0xff]
      %v179 = vld [vmem:[%s1 + $0x8] sm:$0xff]
      %v180 = vld [vmem:[%s1 + $0x10] sm:$0xff]
      %v181 = vld [vmem:[%s1 + $0x18] sm:$0xff]
      %v182 = vld [vmem:[%s1 + $0x20] sm:$0xff]
      %v183 = vld [vmem:[%s1 + $0x28] sm:$0xff]
      %v184 = vld [vmem:[%s1 + $0x30] sm:$0xff]
      %v185 = vld [vmem:[%s1 + $0x38] sm:$0xff]
      %v186 = vld [vmem:[%s1 + $0x40] sm:$0xff]
      %v187 = vld [vmem:[%s1 + $0x48] sm:$0xff]
      %v188 = vld [vmem:[%s2] sm:$0x1]
      %v190 = vperm.slane %v188, 0
      %vm192 = vcmask 654336
      %v194 = vsel %vm192, %v174, 0
      %v197 = vsel %vm192, %v175, 0
      %v200 = vsel %vm192, %v176, 0
      %v203 = vsel %vm192, %v177, 0
      %205 = vmatpush.msra.mxu0 0.0
      %206 = vmatpush.msra.mxu0 0.0
      %207 = vmatpush.msra.mxu0 0.0
      %208 = vmatpush.msra.mxu0 0.0
      %209 = vmatpush.msra.mxu0 0.0
      %210 = vmatpush.msra.mxu0 0.0
      %211 = vmatpush.msra.mxu0 %v187
      %212 = vmatpush.msra.mxu0 %v186
      %213 = vmatpush.msra.mxu0 %v185
      %214 = vmatpush.msra.mxu0 %v184
      %215 = vmatpush.msra.mxu0 %v183
      %216 = vmatpush.msra.mxu0 %v182
      %217 = vmatpush.msra.mxu0 %v181
      %218 = vmatpush.msra.mxu0 %v180
      %219 = vmatpush.msra.mxu0 %v179
      %220 = vmatpush.msra.mxu0 %v178
      %221 = vmatmul.f32.gmra.mxu0 %v194
      %v222 = vpop.f32.mrf.mxu0
      %v223 = vadd.f32 %v190, %v222
      %224 = vmatmul.f32.gmra.mxu0 %v197
      %v225 = vpop.f32.mrf.mxu0
      %v226 = vadd.f32 %v190, %v225
      %227 = vmatmul.f32.gmra.mxu0 %v200
      %v228 = vpop.f32.mrf.mxu0
      %v229 = vadd.f32 %v190, %v228
      %230 = vmatmul.f32.gmra.mxu0 %v203
      %v231 = vpop.f32.mrf.mxu0
      %v232 = vadd.f32 %v190, %v231
      %233 = vdwg.mxu0
      %vm234 = vcmask 195584
      %235 = vst.msk [vmem:[%s172] sm:$0xff] %vm234, %v223
      %236 = vst.msk [vmem:[%s172 + $0x8] sm:$0xff] %vm234, %v226
      %237 = vst.msk [vmem:[%s172 + $0x10] sm:$0xff] %vm234, %v229
      %238 = vst.msk [vmem:[%s172 + $0x18] sm:$0xff] %vm234, %v232
      %s239 = smul.u32 4, %s14
      %p240 = scmp.lt.s32.totalorder %s239, 15
      %s241 = scalar_select %p240, %s239, 15
      %s242 = smul.addr %s241, 8
      %s243 = scalar_lea.vmem %s3, %s242
      // Predicated region
      $region33: #{tpu_custom_call.1} parent=31 // pred_check
        %p244 = pneg %p100
      $region34: #{tpu_custom_call.1} parent=31 // pred_check_branch
        %246 = sbr.rel (%p244) target = $region36
      $region35: #{tpu_custom_call.1} parent=31 // pred_region
        %s247 = smul.u32 4, %s14
      $region36: #{tpu_custom_call.1} parent=31 // pred_fallthru
        _
    $region32: #{tpu_custom_call.1} parent=5 // pred_fallthru
      _
    %p248 = scmp.le.s32.totalorder 2, %s9
    // Predicated region
    $region37: #{tpu_custom_call.1} parent=5 // pred_check
      %p249 = pneg %p248
    $region38: #{tpu_custom_call.1} parent=5 // pred_check_branch
      %251 = sbr.rel (%p249) target = $region40
    $region39: #{tpu_custom_call.1} parent=5 // pred_region
      %s252 = ssub.s32 %s9, 2
      // Predicated region
      $region41: #{tpu_custom_call.1} parent=39 // pred_check
        %p253 = pneg %p106
      $region42: #{tpu_custom_call.1} parent=39 // pred_check_branch
        %255 = sbr.rel (%p253) target = $region44
      $region43: #{tpu_custom_call.1} parent=39 // pred_region
        %s256 = smul.u32 4, %s15
        %p257 = scmp.lt.s32.totalorder %s256, 15
        %s258 = scalar_select %p257, %s256, 15
        %s259 = smul.addr %s258, 8
        %s260 = scalar_lea.vmem %s3, %s259
      $region44: #{tpu_custom_call.1} parent=39 // pred_fallthru
        _
    $region40: #{tpu_custom_call.1} parent=5 // pred_fallthru
      _
  $region6: #{tpu_custom_call.1} parent=0 // loop_footer
    %s13 = sadd.s32 1, %s9
  $region7: #{tpu_custom_call.1} parent=0 // loop_footer_branch
    %8 = sbr.rel target = $region3
  $region8: #{tpu_custom_call.1} parent=0 // loop_exit
    _

</llo_original>
